<compile_context>
chip_gen: v5e
topology: v5e:2x2
jax: 0.10.0
libtpu: 0.0.40
codegen_flags: <defaults>
</compile_context>

<pallas_src>
import functools

import jax
import jax.numpy as jnp
from jax import lax
from jax.experimental import pallas as pl
from jax.experimental.pallas import tpu as pltpu


def _conv1d_im2col_kernel(x_ref, w_ref, b_ref, o_ref, xcol_ref, *,
                          kernel_size: int, dilation: int, pad_left: int,
                          seq_len: int, c_pad: int, hi_prec: bool):
    # x_ref:    (C_pad, B_TILE * L)      lane-dense input slab (channels zero-padded)
    # w_ref:    (C_out, K * C_pad)       tap-major, channel-padded weights (resident)
    # b_ref:    (C_out, 1)               f32 bias (zeros when the module has bias=False)
    # o_ref:    (C_out, B_TILE * L)      lane-dense output slab
    # xcol_ref: (K * C_pad, B_TILE * L)  VMEM im2col scratch
    n_lanes = x_ref.shape[1]
    b_tile = n_lanes // seq_len

    if n_lanes % 128 == 0:
        # ---- production path: K XLU rolls + K aligned full-height masked stores ----
        x = x_ref[...]
        # position of each lane within its batch row (lanes are b*L + l); built with
        # compares/adds only (no vector int div/rem needed).
        lane = lax.broadcasted_iota(jnp.int32, (c_pad, n_lanes), 1)
        pos = lane
        for b in range(1, b_tile):
            pos = pos - jnp.where(lane >= b * seq_len, seq_len, 0)

        for k in range(kernel_size):
            off = k * dilation - pad_left           # src position = dst position + off
            rolled = x if off == 0 else pltpu.roll(x, (-off) % n_lanes, 1)
            # zero the 'same' padding halo and any cross-batch wrap in one select;
            # this IS the scratch (re)initialization - no separate init pass.
            valid = (pos + off >= 0) & (pos + off < seq_len)
            xcol_ref[k * c_pad:(k + 1) * c_pad, :] = (
                jnp.where(valid, rolled, 0).astype(xcol_ref.dtype))
    else:
        # ---- small-shape fallback (lane width < 128, e.g. toy shapes): proven
        # static-slice copies; a single splat zero store covers halo + padding rows.
        xcol_ref[...] = jnp.zeros_like(xcol_ref)
        for k in range(kernel_size):
            off = k * dilation - pad_left
            dst_lo = max(0, -off)
            dst_hi = min(seq_len, seq_len - off)
            if dst_hi <= dst_lo:                    # tap lies entirely in the padding
                continue
            width = dst_hi - dst_lo
            src_lo = dst_lo + off
            for b in range(b_tile):
                base = b * seq_len
                xcol_ref[k * c_pad:(k + 1) * c_pad,
                         base + dst_lo: base + dst_lo + width] = \
                    x_ref[:, base + src_lo: base + src_lo + width]

    # Single deep MXU matmul (contraction = K*C_pad, a clean multiple of the pack);
    # bias added post-matmul in f32 (matches PyTorch even on the bf16 path).
    prec = lax.Precision.HIGHEST if hi_prec else None
    acc = jnp.dot(w_ref[...], xcol_ref[...],
                  preferred_element_type=jnp.float32, precision=prec)
    o_ref[...] = (acc + b_ref[...]).astype(o_ref.dtype)


def _tpu_config():
    """Generation-aware VMEM budget / lane-width target / minimum grid length."""
    kind = ""
    try:
        kind = jax.devices()[0].device_kind.lower()
    except Exception:
        pass
    phys_vmem = (64 << 20) if "v7" in kind else (128 << 20)
    try:
        phys_vmem = int(getattr(pltpu.get_tpu_info(), "vmem_capacity_bytes", phys_vmem))
    except Exception:
        pass
    narrow_mxu = any(v in kind for v in ("v2", "v3", "v4", "v5"))
    lane_multiple = 128 if narrow_mxu else 256      # v6e/v7x MXUs are 256 wide
    min_grid = 2 if "v7" in kind else 1             # keep both v7x TensorCores busy
    vmem_budget = (phys_vmem * 3) // 4              # ~96 MiB (128 MiB parts), ~48 MiB (v7x)
    return vmem_budget, phys_vmem, lane_multiple, min_grid


def _pick_b_tile(batch, l_out, c_pad, kc_pad, c_out, itemsize,
                 vmem_budget, lane_multiple, min_grid):
    """Fold batches per grid step: fit the budget, keep BlockSpec lane alignment,
    prefer MXU-width lane multiples, and (on v7x) a grid of length >= 2."""
    def footprint(bt):
        lanes = bt * l_out
        return (((2 * c_pad + 2 * c_out + kc_pad) * lanes     # dbl-buffered x/out + scratch
                 + 2 * c_out * kc_pad) * itemsize              # weight buffers
                + 2 * c_out * 4)                               # f32 bias block

    def lane_ok(d):   # BlockSpec lane constraint: multiple of 128 or the full array
        return d == batch or (d * l_out) % 128 == 0

    divisors = [d for d in range(batch, 0, -1) if batch % d == 0 and lane_ok(d)]
    fitting = [d for d in divisors if footprint(d) <= vmem_budget]
    if not fitting:
        # TODO(synk): L-axis halo-tiled path for shapes whose single-batch slab
        # already exceeds the budget; take the smallest legal tile for now.
        d = min(divisors)
        return d, footprint(d)
    pools = [
        [d for d in fitting if batch // d >= min_grid and (d * l_out) % lane_multiple == 0],
        [d for d in fitting if batch // d >= min_grid],
        [d for d in fitting if (d * l_out) % lane_multiple == 0],
        fitting,
    ]
    for pool in pools:
        if pool:
            return pool[0], footprint(pool[0])


def same_padding_conv1d(x, weight, bias=None, *, dilation: int = 1):
    """TF-'same' Conv1d, stride=1.
    x: (B, C_in, L), weight: (C_out, C_in, K), bias: (C_out,) or None -> (B, C_out, L)."""
    batch, c_in, seq_len = x.shape
    c_out, _, ksize = weight.shape
    stride = 1

    # --- exact replication of the module's padding arithmetic (all static) ---
    out_rows = (seq_len + stride - 1) // stride
    padding_rows = max(0, (out_rows - 1) * stride + (ksize - 1) * dilation + 1 - seq_len)
    extra = 1 if (dilation % 2 != 0 and ksize % 2 == 0) else 0   # prepended zero column
    pad = padding_rows // 2
    pad_left = pad + extra
    l_out = seq_len + extra + 2 * pad - (ksize - 1) * dilation
    assert l_out == seq_len  # stride-1 'same' => output length == input length

    compute_dtype = x.dtype
    itemsize = jnp.dtype(compute_dtype).itemsize
    hi_prec = jnp.dtype(compute_dtype) == jnp.dtype(jnp.float32)
    pack = 32 // itemsize                               # sublane pack: 8 f32 / 16 bf16
    c_pad = ((c_in + pack - 1) // pack) * pack
    kc_pad = ksize * c_pad

    # Layout plumbing only: (B, C_in, L) -> lane-dense, channel-padded (C_pad, B*L) slab.
    x2d = jnp.transpose(x, (1, 0, 2)).reshape(c_in, batch * seq_len)
    if c_pad != c_in:
        x2d = jnp.pad(x2d, ((0, c_pad - c_in), (0, 0)))
    x2d = x2d.astype(compute_dtype)

    # Weights: (C_out, C_in, K) -> tap-major, channel-padded (C_out, K*C_pad).
    w_t = jnp.transpose(weight, (0, 2, 1))              # (C_out, K, C_in)
    if c_pad != c_in:
        w_t = jnp.pad(w_t, ((0, 0), (0, 0), (0, c_pad - c_in)))
    w_flat = w_t.reshape(c_out, kc_pad).astype(compute_dtype)

    b_col = (bias if bias is not None else jnp.zeros((c_out,), jnp.float32))
    b_col = b_col.astype(jnp.float32).reshape(c_out, 1)

    vmem_budget, phys_vmem, lane_multiple, min_grid = _tpu_config()
    b_tile, vmem_est = _pick_b_tile(batch, l_out, c_pad, kc_pad, c_out, itemsize,
                                    vmem_budget, lane_multiple, min_grid)
    n_lanes = b_tile * l_out
    grid = (batch // b_tile,)
    if vmem_est <= vmem_budget:
        vmem_limit = int(max(min(2 * vmem_est, vmem_budget), 4 << 20))
    else:
        vmem_limit = int(min(vmem_est + vmem_est // 4, (phys_vmem * 9) // 10))

    kernel = functools.partial(_conv1d_im2col_kernel,
                               kernel_size=ksize, dilation=dilation,
                               pad_left=pad_left, seq_len=seq_len,
                               c_pad=c_pad, hi_prec=hi_prec)

    out_slab = pl.pallas_call(
        kernel,
        out_shape=jax.ShapeDtypeStruct((c_out, batch * l_out), x.dtype),
        grid=grid,
        in_specs=[
            pl.BlockSpec((c_pad, n_lanes), lambda i: (0, i)),
            # constant block index -> Mosaic keeps the weights resident (no per-step re-DMA)
            pl.BlockSpec((c_out, kc_pad), lambda i: (0, 0)),
            pl.BlockSpec((c_out, 1), lambda i: (0, 0)),
        ],
        out_specs=pl.BlockSpec((c_out, n_lanes), lambda i: (0, i)),
        scratch_shapes=[pltpu.VMEM((kc_pad, n_lanes), compute_dtype)],
        compiler_params=pltpu.CompilerParams(
            dimension_semantics=("parallel",),
            vmem_limit_bytes=vmem_limit,
        ),
    )(x2d, w_flat, b_col)

    # Layout plumbing only: (C_out, B*L) lane-dense slab -> (B, C_out, L).
    return jnp.transpose(out_slab.reshape(c_out, batch, l_out), (1, 0, 2))


def _reference(x, weight, bias, *, dilation: int):
    """Pure-JAX reference (same padding logic, lax conv) for sanity checking."""
    batch, c_in, seq_len = x.shape
    c_out, _, ksize = weight.shape
    stride = 1
    out_rows = (seq_len + stride - 1) // stride
    padding_rows = max(0, (out_rows - 1) * stride + (ksize - 1) * dilation + 1 - seq_len)
    x_work = x
    if dilation % 2 != 0 and ksize % 2 == 0:
        x_work = jnp.concatenate([jnp.zeros((batch, c_in, 1), x.dtype), x_work], axis=2)
    pad = padding_rows // 2
    y = lax.conv_general_dilated(
        x_work, weight,
        window_strides=(stride,),
        padding=[(pad, pad)],
        rhs_dilation=(dilation,),
        dimension_numbers=("NCH", "OIH", "NCH"),
        precision=lax.Precision.HIGHEST,
    )
    if bias is not None:
        y = y + bias.reshape(1, c_out, 1)
    return y


if __name__ == "__main__":
    def run_case(key, batch, c_in, c_out, ksize, seq_len, dilation, use_bias):
        kx, kw, kb = jax.random.split(key, 3)
        x = jax.random.normal(kx, (batch, c_in, seq_len), dtype=jnp.float32)
        w = jax.random.normal(kw, (c_out, c_in, ksize), dtype=jnp.float32)
        b = jax.random.normal(kb, (c_out,), dtype=jnp.float32) if use_bias else None
        out = jax.block_until_ready(same_padding_conv1d(x, w, b, dilation=dilation))
        ref = jax.block_until_ready(_reference(x, w, b, dilation=dilation))
        assert out.shape == (batch, c_out, seq_len), out.shape
        assert jnp.allclose(out, ref, atol=1e-4, rtol=1e-4), (
            f"mismatch: max abs err {jnp.max(jnp.abs(out - ref))}")

    key = jax.random.PRNGKey(0)
    k1, k2 = jax.random.split(key)
    # Lane-dense production path (b_tile * L is a multiple of 128 -> roll-based im2col).
    run_case(k1, batch=2, c_in=4, c_out=8, ksize=3, seq_len=64, dilation=1, use_bias=True)
    # Small-shape fallback path + even-kernel 'extra' prepended zero column, no bias.
    run_case(k2, batch=2, c_in=4, c_out=8, ksize=2, seq_len=16, dilation=1, use_bias=False)

    print("KERNEL_OK")
</pallas_src>

<mosaic_0001>
module attributes {stable_mosaic.version = 11 : i64} {
  func.func @_conv1d_im2col_kernel(%arg0: i32, %arg1: memref<8x128xf32, #tpu.memory_space<vmem>>, %arg2: memref<8x24xf32, #tpu.memory_space<vmem>>, %arg3: memref<8x1xf32, #tpu.memory_space<vmem>>, %arg4: memref<8x128xf32, #tpu.memory_space<vmem>>, %arg5: memref<24x128xf32, #tpu.memory_space<vmem>>) attributes {dimension_semantics = [#tpu.dimension_semantics<parallel>], iteration_bounds = array<i64: 1>, scalar_prefetch = 0 : i64, scratch_operands = 1 : i64, tpu.core_type = #tpu.core_type<tc>, window_params = [{transform_indices = @transform_0, window_bounds = array<i64: 8, 128>}, {pipeline_mode = #tpu.pipeline_mode<synchronous>, transform_indices = @transform_1, window_bounds = array<i64: 8, 24>}, {pipeline_mode = #tpu.pipeline_mode<synchronous>, transform_indices = @transform_2, window_bounds = array<i64: 8, 1>}, {transform_indices = @transform_3, window_bounds = array<i64: 8, 128>}]} {
    %c0 = arith.constant 0 : index
    %c0_0 = arith.constant 0 : index
    %0 = vector.load %arg1[%c0, %c0_0] : memref<8x128xf32, #tpu.memory_space<vmem>>, vector<8x128xf32>
    %1 = tpu.iota {dimensions = array<i32: 1>} : vector<8x128xi32>
    %c64_i32 = arith.constant 64 : i32
    %2 = vector.broadcast %c64_i32 : i32 to vector<8x128xi32>
    %3 = arith.cmpi sge, %1, %2 : vector<8x128xi32>
    %c64_i32_1 = arith.constant 64 : i32
    %c0_i32 = arith.constant 0 : i32
    %4 = vector.broadcast %c64_i32_1 : i32 to vector<8x128xi32>
    %5 = vector.broadcast %c0_i32 : i32 to vector<8x128xi32>
    %6 = arith.select %3, %4, %5 : vector<8x128xi1>, vector<8x128xi32>
    %7 = arith.subi %1, %6 : vector<8x128xi32>
    %c1_i32 = arith.constant 1 : i32
    %8 = tpu.dynamic_rotate %0 by %c1_i32 dim 1 : vector<8x128xf32>, i32 -> vector<8x128xf32>
    %c-1_i32 = arith.constant -1 : i32
    %9 = vector.broadcast %c-1_i32 : i32 to vector<8x128xi32>
    %10 = arith.addi %7, %9 : vector<8x128xi32>
    %c0_i32_2 = arith.constant 0 : i32
    %11 = vector.broadcast %c0_i32_2 : i32 to vector<8x128xi32>
    %12 = arith.cmpi sge, %10, %11 : vector<8x128xi32>
    %c-1_i32_3 = arith.constant -1 : i32
    %13 = vector.broadcast %c-1_i32_3 : i32 to vector<8x128xi32>
    %14 = arith.addi %7, %13 : vector<8x128xi32>
    %c64_i32_4 = arith.constant 64 : i32
    %15 = vector.broadcast %c64_i32_4 : i32 to vector<8x128xi32>
    %16 = arith.cmpi slt, %14, %15 : vector<8x128xi32>
    %17 = arith.andi %12, %16 : vector<8x128xi1>
    %c0_i32_5 = arith.constant 0 : i32
    %18 = arith.sitofp %c0_i32_5 : i32 to f32
    %19 = vector.broadcast %18 : f32 to vector<8x128xf32>
    %20 = arith.select %17, %8, %19 : vector<8x128xi1>, vector<8x128xf32>
    %c0_6 = arith.constant 0 : index
    %c0_7 = arith.constant 0 : index
    %21 = vector.load %arg5[%c0_6, %c0_7] : memref<24x128xf32, #tpu.memory_space<vmem>>, vector<8x128xf32>
    tpu.vector_store %arg5[%c0_6, %c0_7], %20 {strides = array<i32>} : memref<24x128xf32, #tpu.memory_space<vmem>>, vector<8x128xf32>,
    %c0_i32_8 = arith.constant 0 : i32
    %22 = vector.broadcast %c0_i32_8 : i32 to vector<8x128xi32>
    %23 = arith.addi %7, %22 : vector<8x128xi32>
    %c0_i32_9 = arith.constant 0 : i32
    %24 = vector.broadcast %c0_i32_9 : i32 to vector<8x128xi32>
    %25 = arith.cmpi sge, %23, %24 : vector<8x128xi32>
    %c0_i32_10 = arith.constant 0 : i32
    %26 = vector.broadcast %c0_i32_10 : i32 to vector<8x128xi32>
    %27 = arith.addi %7, %26 : vector<8x128xi32>
    %c64_i32_11 = arith.constant 64 : i32
    %28 = vector.broadcast %c64_i32_11 : i32 to vector<8x128xi32>
    %29 = arith.cmpi slt, %27, %28 : vector<8x128xi32>
    %30 = arith.andi %25, %29 : vector<8x128xi1>
    %c0_i32_12 = arith.constant 0 : i32
    %31 = arith.sitofp %c0_i32_12 : i32 to f32
    %32 = vector.broadcast %31 : f32 to vector<8x128xf32>
    %33 = arith.select %30, %0, %32 : vector<8x128xi1>, vector<8x128xf32>
    %c8 = arith.constant 8 : index
    %c0_13 = arith.constant 0 : index
    %34 = vector.load %arg5[%c8, %c0_13] : memref<24x128xf32, #tpu.memory_space<vmem>>, vector<8x128xf32>
    tpu.vector_store %arg5[%c8, %c0_13], %33 {strides = array<i32>} : memref<24x128xf32, #tpu.memory_space<vmem>>, vector<8x128xf32>,
    %c127_i32 = arith.constant 127 : i32
    %35 = tpu.dynamic_rotate %0 by %c127_i32 dim 1 : vector<8x128xf32>, i32 -> vector<8x128xf32>
    %c1_i32_14 = arith.constant 1 : i32
    %36 = vector.broadcast %c1_i32_14 : i32 to vector<8x128xi32>
    %37 = arith.addi %7, %36 : vector<8x128xi32>
    %c0_i32_15 = arith.constant 0 : i32
    %38 = vector.broadcast %c0_i32_15 : i32 to vector<8x128xi32>
    %39 = arith.cmpi sge, %37, %38 : vector<8x128xi32>
    %c1_i32_16 = arith.constant 1 : i32
    %40 = vector.broadcast %c1_i32_16 : i32 to vector<8x128xi32>
    %41 = arith.addi %7, %40 : vector<8x128xi32>
    %c64_i32_17 = arith.constant 64 : i32
    %42 = vector.broadcast %c64_i32_17 : i32 to vector<8x128xi32>
    %43 = arith.cmpi slt, %41, %42 : vector<8x128xi32>
    %44 = arith.andi %39, %43 : vector<8x128xi1>
    %c0_i32_18 = arith.constant 0 : i32
    %45 = arith.sitofp %c0_i32_18 : i32 to f32
    %46 = vector.broadcast %45 : f32 to vector<8x128xf32>
    %47 = arith.select %44, %35, %46 : vector<8x128xi1>, vector<8x128xf32>
    %c16 = arith.constant 16 : index
    %c0_19 = arith.constant 0 : index
    %48 = vector.load %arg5[%c16, %c0_19] : memref<24x128xf32, #tpu.memory_space<vmem>>, vector<8x128xf32>
    tpu.vector_store %arg5[%c16, %c0_19], %47 {strides = array<i32>} : memref<24x128xf32, #tpu.memory_space<vmem>>, vector<8x128xf32>,
    %c0_20 = arith.constant 0 : index
    %c0_21 = arith.constant 0 : index
    %49 = vector.load %arg2[%c0_20, %c0_21] : memref<8x24xf32, #tpu.memory_space<vmem>>, vector<8x24xf32>
    %c0_22 = arith.constant 0 : index
    %c0_23 = arith.constant 0 : index
    %50 = vector.load %arg5[%c0_22, %c0_23] : memref<24x128xf32, #tpu.memory_space<vmem>>, vector<24x128xf32>
    %cst = arith.constant dense<0.000000e+00> : vector<8x128xf32>
    %51 = tpu.matmul %49, %50, %cst {dimension_numbers = #tpu.dot_dimension_numbers<[1], [0], [0], [1], [0, 0, 1, 1], [], []>, precision = #tpu.contract_precision<fp32>} : vector<8x24xf32>, vector<24x128xf32>, vector<8x128xf32> -> vector<8x128xf32>
    %c0_24 = arith.constant 0 : index
    %c0_25 = arith.constant 0 : index
    %52 = vector.load %arg3[%c0_24, %c0_25] : memref<8x1xf32, #tpu.memory_space<vmem>>, vector<8x1xf32>
    %53 = vector.broadcast %52 : vector<8x1xf32> to vector<8x128xf32>
    %54 = arith.addf %51, %53 : vector<8x128xf32>
    %c0_26 = arith.constant 0 : index
    %c0_27 = arith.constant 0 : index
    %55 = vector.load %arg4[%c0_26, %c0_27] : memref<8x128xf32, #tpu.memory_space<vmem>>, vector<8x128xf32>
    tpu.vector_store %arg4[%c0_26, %c0_27], %54 {strides = array<i32>} : memref<8x128xf32, #tpu.memory_space<vmem>>, vector<8x128xf32>,
    return
  }
  func.func @transform_0(%arg0: i32) -> (i32, i32) {
    %c0_i32 = arith.constant 0 : i32
    %c0_i32_0 = arith.constant 0 : i32
    return %c0_i32, %arg0 : i32, i32
  }
  func.func @transform_1(%arg0: i32) -> (i32, i32) {
    %c0_i32 = arith.constant 0 : i32
    %c0_i32_0 = arith.constant 0 : i32
    %c0_i32_1 = arith.constant 0 : i32
    return %c0_i32, %c0_i32_0 : i32, i32
  }
  func.func @transform_2(%arg0: i32) -> (i32, i32) {
    %c0_i32 = arith.constant 0 : i32
    %c0_i32_0 = arith.constant 0 : i32
    %c0_i32_1 = arith.constant 0 : i32
    return %c0_i32, %c0_i32_0 : i32, i32
  }
  func.func @transform_3(%arg0: i32) -> (i32, i32) {
    %c0_i32 = arith.constant 0 : i32
    %c0_i32_0 = arith.constant 0 : i32
    return %c0_i32, %arg0 : i32, i32
  }
}

</mosaic_0001>

<llo_original>
// kernel: tpu_custom_call.1
$region0: #{tpu_custom_call.1}
  #allocation0 [shape = 'u32[]', space=smem, size = 0x4, offset = 0x4, fixed_abs, tag = 'smem constant byte address 0x4 - core index']
  #allocation1 [shape = 'u32[72,128]{1,0:T(1,128)}', space=vmem, size = 0x9000, scoped, tag = 'internal scratch']
  #allocation2 [shape = 'f32[24,128]{1,0:T(8,128)}', space=vmem, size = 0x3000, scoped, tag = 'scratch operand']
  %s0 = inlined_call_operand.vmem [shape: f32[8,128], index: 0, kind: input, shape index: {}]
  %s1 = inlined_call_operand.hbm [shape: f32[8,24], index: 1, kind: input, shape index: {}]
  %s2 = inlined_call_operand.vmem [shape: f32[8,1], index: 2, kind: input, shape index: {}]
  %s3 = inlined_call_operand.hbm [shape: f32[8,128], index: 3, kind: output, shape index: {}]
  %s4 = sld [smem:[#allocation0]]
  $region26: #{tpu_custom_call.1} parent=0
    _
  %s6 = ssub.s32 1, %s4
  %s7 = scalar_select 0, %s6, %s4
  $region1: #{tpu_custom_call.1} parent=0
    #allocation3 [shape = 'u8[4096]{0}', space=vmem, size = 0x1000, scoped, tag = 'input window, operand 1, single buffered']
    #allocation4 [shape = 's32[1]{0}', space=sflag, size = 0x4, scoped, tag = 'scoped memory for tpu_custom_call.1']
    #allocation5 [shape = 's32[1]{0}', space=sflag, size = 0x4, scoped, tag = 'scoped memory for tpu_custom_call.1']
    #allocation6 [shape = 'u8[4096]{0}', space=vmem, size = 0x1000, scoped, tag = 'output window, operand 0, single buffered']
    %8 = vsyncpa [#allocation4], 0
    %9 = vsyncpa [#allocation5], 0
    // Predicated region
    $region2: #{tpu_custom_call.1} parent=1 // pred_check
      _
    $region3: #{tpu_custom_call.1} parent=1 // pred_check_branch
      %11 = sbr.rel (0) target = $region5
    $region4: #{tpu_custom_call.1} parent=1 // pred_region
      _
    $region5: #{tpu_custom_call.1} parent=1 // pred_fallthru
      _
    // Predicated region
    $region6: #{tpu_custom_call.1} parent=1 // pred_check
      _
    $region7: #{tpu_custom_call.1} parent=1 // pred_check_branch
      %13 = sbr.rel (0) target = $region9
    $region8: #{tpu_custom_call.1} parent=1 // pred_region
      %15 = vsyncadd [#allocation4], 0
      %s17 = sshll.u32 %s1, 4
      %s18 = int_to_ptr.hbm [resolvable:$true] %s17
      %s19 = sshll.u32 [#allocation3], 4
      %s20 = int_to_ptr.vmem [resolvable:$true] %s19
      %22 = dma.hbm_to_vmem [thread:$0]  %s18, 128, %s20, [#allocation4]
    $region9: #{tpu_custom_call.1} parent=1 // pred_fallthru
      _
    // Predicated region
    $region10: #{tpu_custom_call.1} parent=1 // pred_check
      _
    $region11: #{tpu_custom_call.1} parent=1 // pred_check_branch
      %24 = sbr.rel (0) target = $region13
    $region12: #{tpu_custom_call.1} parent=1 // pred_region
      _
    $region13: #{tpu_custom_call.1} parent=1 // pred_fallthru
      _
    // Predicated region
    $region14: #{tpu_custom_call.1} parent=1 // pred_check
      _
    $region15: #{tpu_custom_call.1} parent=1 // pred_check_branch
      %26 = sbr.rel (0) target = $region17
    $region16: #{tpu_custom_call.1} parent=1 // pred_region
      %28 = dma.done [#allocation4], 128
    $region17: #{tpu_custom_call.1} parent=1 // pred_fallthru
      _
    %v29 = vld [vmem:[%s0] sm:$0xff]
    %v30 = vlaneseq
    %v31 = vand.u32 %v30, 127
    %vm32 = vcmp.ge.s32.totalorder %v31, 64
    %v33 = vsel %vm32, 64, 0
    %v34 = vsub.s32 %v31, %v33
    %35 = vrot.lane.b32.xlu0 %v29, 1
    %v36 = vpop.permute.xlu0 %35
    %v37 = vadd.s32 %v34, 4294967295
    %vm38 = vcmp.ge.s32.totalorder %v37, 0
    %vm39 = vcmp.lt.s32.totalorder %v37, 64
    %vm40 = vmand %vm38, %vm39
    %v41 = vsel %vm40, %v36, 0.0
    %42 = vst [vmem:[#allocation2] sm:$0xff] %v41
    %vm43 = vcmp.ge.s32.totalorder %v34, 0
    %vm44 = vcmp.lt.s32.totalorder %v34, 64
    %vm45 = vmand %vm43, %vm44
    %v46 = vsel %vm45, %v29, 0.0
    %47 = vst [vmem:[#allocation2 + $0x8] sm:$0xff] %v46
    %48 = vrot.lane.b32.xlu0 %v29, 127
    %v49 = vpop.permute.xlu0 %48
    %v50 = vadd.s32 %v34, 1
    %vm51 = vcmp.ge.s32.totalorder %v50, 0
    %vm52 = vcmp.lt.s32.totalorder %v50, 64
    %vm53 = vmand %vm51, %vm52
    %v54 = vsel %vm53, %v49, 0.0
    %55 = vst [vmem:[#allocation2 + $0x10] sm:$0xff] %v54
    %v56 = vld [vmem:[#allocation3] sm:$0xff]
    %v57 = vld [vmem:[#allocation2] sm:$0xff]
    %v58 = vld [vmem:[#allocation2 + $0x8] sm:$0xff]
    %v59 = vld [vmem:[#allocation2 + $0x10] sm:$0xff]
    %v60 = vld [vmem:[%s2] sm:$0xff]
    %62 = vset.pattern.permute.xlu0 0
    %63 = vperm.xlu0 %62, %v60
    %v64 = vpop.permute.xlu0 %63
    %vm66 = vcmask 195584
    %v68 = vsel %vm66, %v56, 0
    %70 = vmatpush.msra.mxu0 0.0
    %71 = vmatpush.msra.mxu0 0.0
    %72 = vmatpush.msra.mxu0 0.0
    %73 = vmatpush.msra.mxu0 0.0
    %74 = vmatpush.msra.mxu0 0.0
    %75 = vmatpush.msra.mxu0 0.0
    %76 = vmatpush.msra.mxu0 0.0
    %77 = vmatpush.msra.mxu0 0.0
    %78 = vmatpush.msra.mxu0 0.0
    %79 = vmatpush.msra.mxu0 0.0
    %80 = vmatpush.msra.mxu0 0.0
    %81 = vmatpush.msra.mxu0 0.0
    %82 = vmatpush.msra.mxu0 0.0
    %v83 = vand.u32 %v59, 4294901760
    %84 = vmatpush.msra.mxu0 %v83
    %v85 = vand.u32 %v58, 4294901760
    %86 = vmatpush.msra.mxu0 %v85
    %v87 = vand.u32 %v57, 4294901760
    %88 = vmatpush.msra.mxu0 %v87
    %v89 = vand.u32 %v68, 4294901760
    %v90 = vsub.f32 %v68, %v89
    %v91 = vand.u32 %v90, 4294901760
    %v92 = vsub.f32 %v90, %v91
    %v93 = vand.u32 %v92, 4294901760
    %94 = vmatmul.f32.gmra.mxu0 %v93
    %v95 = vpop.f32.mrf.mxu0
    %v96 = vadd.f32 %v64, %v95
    %97 = vdwg.mxu0
    %98 = vmatpush.msra.mxu0 0.0
    %99 = vmatpush.msra.mxu0 0.0
    %100 = vmatpush.msra.mxu0 0.0
    %101 = vmatpush.msra.mxu0 0.0
    %102 = vmatpush.msra.mxu0 0.0
    %103 = vmatpush.msra.mxu0 0.0
    %104 = vmatpush.msra.mxu0 0.0
    %105 = vmatpush.msra.mxu0 0.0
    %106 = vmatpush.msra.mxu0 0.0
    %107 = vmatpush.msra.mxu0 0.0
    %108 = vmatpush.msra.mxu0 0.0
    %109 = vmatpush.msra.mxu0 0.0
    %110 = vmatpush.msra.mxu0 0.0
    %v111 = vand.u32 %v59, 4294901760
    %v112 = vsub.f32 %v59, %v111
    %v113 = vand.u32 %v112, 4294901760
    %v114 = vsub.f32 %v112, %v113
    %v115 = vand.u32 %v114, 4294901760
    %116 = vmatpush.msra.mxu0 %v115
    %v117 = vand.u32 %v58, 4294901760
    %v118 = vsub.f32 %v58, %v117
    %v119 = vand.u32 %v118, 4294901760
    %v120 = vsub.f32 %v118, %v119
    %v121 = vand.u32 %v120, 4294901760
    %122 = vmatpush.msra.mxu0 %v121
    %v123 = vand.u32 %v57, 4294901760
    %v124 = vsub.f32 %v57, %v123
    %v125 = vand.u32 %v124, 4294901760
    %v126 = vsub.f32 %v124, %v125
    %v127 = vand.u32 %v126, 4294901760
    %128 = vmatpush.msra.mxu0 %v127
    %v129 = vand.u32 %v68, 4294901760
    %130 = vmatmul.f32.gmra.mxu0 %v129
    %v131 = vpop.f32.mrf.mxu0
    %v132 = vadd.f32 %v96, %v131
    %133 = vdwg.mxu0
    %134 = vmatpush.msra.mxu0 0.0
    %135 = vmatpush.msra.mxu0 0.0
    %136 = vmatpush.msra.mxu0 0.0
    %137 = vmatpush.msra.mxu0 0.0
    %138 = vmatpush.msra.mxu0 0.0
    %139 = vmatpush.msra.mxu0 0.0
    %140 = vmatpush.msra.mxu0 0.0
    %141 = vmatpush.msra.mxu0 0.0
    %142 = vmatpush.msra.mxu0 0.0
    %143 = vmatpush.msra.mxu0 0.0
    %144 = vmatpush.msra.mxu0 0.0
    %145 = vmatpush.msra.mxu0 0.0
    %146 = vmatpush.msra.mxu0 0.0
    %v147 = vand.u32 %v59, 4294901760
    %v148 = vsub.f32 %v59, %v147
    %149 = vmatpush.msra.mxu0 %v148
    %v150 = vand.u32 %v58, 4294901760
    %v151 = vsub.f32 %v58, %v150
    %152 = vmatpush.msra.mxu0 %v151
    %v153 = vand.u32 %v57, 4294901760
    %v154 = vsub.f32 %v57, %v153
    %155 = vmatpush.msra.mxu0 %v154
    %v156 = vand.u32 %v68, 4294901760
    %v157 = vsub.f32 %v68, %v156
    %158 = vmatmul.f32.gmra.mxu0 %v157
    %v159 = vpop.f32.mrf.mxu0
    %v160 = vadd.f32 %v132, %v159
    %161 = vdwg.mxu0
    %162 = vmatpush.msra.mxu0 0.0
    %163 = vmatpush.msra.mxu0 0.0
    %164 = vmatpush.msra.mxu0 0.0
    %165 = vmatpush.msra.mxu0 0.0
    %166 = vmatpush.msra.mxu0 0.0
    %167 = vmatpush.msra.mxu0 0.0
    %168 = vmatpush.msra.mxu0 0.0
    %169 = vmatpush.msra.mxu0 0.0
    %170 = vmatpush.msra.mxu0 0.0
    %171 = vmatpush.msra.mxu0 0.0
    %172 = vmatpush.msra.mxu0 0.0
    %173 = vmatpush.msra.mxu0 0.0
    %174 = vmatpush.msra.mxu0 0.0
    %v175 = vand.u32 %v59, 4294901760
    %176 = vmatpush.msra.mxu0 %v175
    %v177 = vand.u32 %v58, 4294901760
    %178 = vmatpush.msra.mxu0 %v177
    %v179 = vand.u32 %v57, 4294901760
    %180 = vmatpush.msra.mxu0 %v179
    %v181 = vand.u32 %v68, 4294901760
    %v182 = vsub.f32 %v68, %v181
    %v183 = vand.u32 %v182, 4294901760
    %184 = vmatmul.f32.gmra.mxu0 %v183
    %v185 = vpop.f32.mrf.mxu0
    %v186 = vadd.f32 %v160, %v185
    %187 = vdwg.mxu0
    %188 = vmatpush.msra.mxu0 0.0
    %189 = vmatpush.msra.mxu0 0.0
    %190 = vmatpush.msra.mxu0 0.0
    %191 = vmatpush.msra.mxu0 0.0
    %192 = vmatpush.msra.mxu0 0.0
    %193 = vmatpush.msra.mxu0 0.0
    %194 = vmatpush.msra.mxu0 0.0
    %195 = vmatpush.msra.mxu0 0.0
    %196 = vmatpush.msra.mxu0 0.0
    %197 = vmatpush.msra.mxu0 0.0
    %198 = vmatpush.msra.mxu0 0.0
    %199 = vmatpush.msra.mxu0 0.0
    %200 = vmatpush.msra.mxu0 0.0
    %v201 = vand.u32 %v59, 4294901760
    %v202 = vsub.f32 %v59, %v201
    %v203 = vand.u32 %v202, 4294901760
    %204 = vmatpush.msra.mxu0 %v203
    %v205 = vand.u32 %v58, 4294901760
    %v206 = vsub.f32 %v58, %v205
    %v207 = vand.u32 %v206, 4294901760
    %208 = vmatpush.msra.mxu0 %v207
    %v209 = vand.u32 %v57, 4294901760
    %v210 = vsub.f32 %v57, %v209
    %v211 = vand.u32 %v210, 4294901760
    %212 = vmatpush.msra.mxu0 %v211
    %v213 = vand.u32 %v68, 4294901760
    %214 = vmatmul.f32.gmra.mxu0 %v213
    %v215 = vpop.f32.mrf.mxu0
    %v216 = vadd.f32 %v186, %v215
    %217 = vdwg.mxu0
    %218 = vmatpush.msra.mxu0 0.0
    %219 = vmatpush.msra.mxu0 0.0
    %220 = vmatpush.msra.mxu0 0.0
    %221 = vmatpush.msra.mxu0 0.0
    %222 = vmatpush.msra.mxu0 0.0
    %223 = vmatpush.msra.mxu0 0.0
    %224 = vmatpush.msra.mxu0 0.0
    %225 = vmatpush.msra.mxu0 0.0
    %226 = vmatpush.msra.mxu0 0.0
    %227 = vmatpush.msra.mxu0 0.0
    %228 = vmatpush.msra.mxu0 0.0
    %229 = vmatpush.msra.mxu0 0.0
    %230 = vmatpush.msra.mxu0 0.0
    %v231 = vand.u32 %v59, 4294901760
    %232 = vmatpush.msra.mxu0 %v231
    %v233 = vand.u32 %v58, 4294901760
    %234 = vmatpush.msra.mxu0 %v233
    %v235 = vand.u32 %v57, 4294901760
    %236 = vmatpush.msra.mxu0 %v235
    %v237 = vand.u32 %v68, 4294901760
    %238 = vmatmul.f32.gmra.mxu0 %v237
    %v239 = vpop.f32.mrf.mxu0
    %v240 = vadd.f32 %v216, %v239
    %241 = vdwg.mxu0
    %242 = vst [vmem:[#allocation6] sm:$0xff] %v240
    // Predicated region
    $region18: #{tpu_custom_call.1} parent=1 // pred_check
      _
    $region19: #{tpu_custom_call.1} parent=1 // pred_check_branch
      %244 = sbr.rel (0) target = $region21
    $region20: #{tpu_custom_call.1} parent=1 // pred_region
      %246 = vsyncadd [#allocation5], 0
      %s248 = sshll.u32 [#allocation6], 4
      %s249 = int_to_ptr.vmem [resolvable:$true] %s248
      %s250 = sshll.u32 %s3, 4
      %s251 = int_to_ptr.hbm [resolvable:$true] %s250
      %253 = dma.vmem_to_hbm [thread:$0]  %s249, 128, %s251, [#allocation5]
    $region21: #{tpu_custom_call.1} parent=1 // pred_fallthru
      _
    // Predicated region
    $region22: #{tpu_custom_call.1} parent=1 // pred_check
      _
    $region23: #{tpu_custom_call.1} parent=1 // pred_check_branch
      %255 = sbr.rel (0) target = $region25
    $region24: #{tpu_custom_call.1} parent=1 // pred_region
      %257 = dma.done [#allocation5], 128
    $region25: #{tpu_custom_call.1} parent=1 // pred_fallthru
      _
    %258 = vsyncpa [#allocation4], 1
    %259 = vsyncpa [#allocation5], 1

</llo_original>
